<compile_context>
chip_gen: v5e
topology: v5e:2x2
jax: 0.10.0
libtpu: 0.0.40
codegen_flags: <defaults>
</compile_context>

<pallas_src>
import functools

import jax
import jax.numpy as jnp
from jax.experimental import pallas as pl
from jax.experimental.pallas import tpu as pltpu

# F.pairwise_distance default eps: added to the elementwise difference.
PAIRWISE_EPS = 1e-6


def _vmem_budget_bytes():
    """Generation-aware budget for the streamed input working set."""
    vmem_phys = 64 * 1024 * 1024  # conservative default (v7x per-TC VMEM)
    try:
        get_info = getattr(pltpu, "get_tpu_info", None)
        if get_info is not None:
            vmem_phys = int(getattr(get_info(), "vmem_capacity_bytes", vmem_phys))
    except Exception:
        pass
    if vmem_phys >= 128 * 1024 * 1024:   # v5e / v6e
        return 24 * 1024 * 1024
    return 14 * 1024 * 1024              # v7x (64 MiB physical) or unknown


def _contrastive_kernel(margin_ref, x1_ref, x2_ref, lab_ref, out_ref,
                        *, groups, seg_len, tile_rows, valid_rows):
    """One grid step: loss partial-sum over a (tile_rows, groups*seg_len) tile."""
    i = pl.program_id(0)

    x1 = x1_ref[...].astype(jnp.float32)        # (tb, Dp) - upcast in-kernel
    x2 = x2_ref[...].astype(jnp.float32)
    lab = lab_ref[...].astype(jnp.float32)      # (tb, groups)
    margin = margin_ref[0]                      # SMEM scalar

    diff = x1 - x2 + PAIRWISE_EPS               # VPU
    sq = diff * diff                            # (tb, Dp)

    if groups == 1:
        # Plain layout: one original row per tile row.
        sq_dist = jnp.sum(sq, axis=1, keepdims=True)           # (tb, 1)  XLU
        dist = jnp.sqrt(sq_dist)                               # EUP (hinge only)
        hinge = jnp.maximum(margin - dist, 0.0)
        loss_rows = (1.0 - lab) * sq_dist + lab * (hinge * hinge)
    else:
        # Lane-dense packed layout: `groups` original rows share one 128-lane
        # tile row; do a segmented (masked) reduction per group.
        dp = groups * seg_len
        lane = jax.lax.broadcasted_iota(jnp.int32, (tile_rows, dp), 1)
        lane_g = jax.lax.broadcasted_iota(jnp.int32, (tile_rows, groups), 1)
        loss_rows = jnp.zeros((tile_rows, 1), jnp.float32)
        for j in range(groups):                 # groups <= 8, static unroll
            seg = (lane >= j * seg_len) & (lane < (j + 1) * seg_len)
            sq_dist = jnp.sum(jnp.where(seg, sq, 0.0), axis=1, keepdims=True)
            dist = jnp.sqrt(sq_dist)
            hinge = jnp.maximum(margin - dist, 0.0)
            lab_j = jnp.sum(jnp.where(lane_g == j, lab, 0.0), axis=1,
                            keepdims=True)      # (tb, 1) label of group j
            loss_rows = loss_rows + (1.0 - lab_j) * sq_dist + lab_j * (hinge * hinge)

    # Mask garbage rows of a partial last tile before the in-tile reduction.
    row = jax.lax.broadcasted_iota(jnp.int32, (tile_rows, 1), 0)
    ok = (i * tile_rows + row) < valid_rows
    tile_sum = jnp.sum(jnp.where(ok, loss_rows, 0.0))

    # Lane-dense, unmasked (1, 8, 128) store of the per-tile partial sum.
    out_ref[...] = jnp.zeros((1, 8, 128), jnp.float32) + tile_sum


def contrastive_loss(output1, output2, label, *, margin=2.0, block_rows=None):
    B, D = output1.shape
    assert output2.shape == (B, D)
    assert label.shape == (B, 1)

    # Lane-dense packing for small D: view (B, D) as (B/g, g*D) with g*D = 128.
    g = 1
    if D < 128 and 128 % D == 0:
        cand = 128 // D
        if cand <= 8 and B % cand == 0:
            g = cand
    Bp, Dp = B // g, D * g
    x1 = output1.reshape(Bp, Dp) if g > 1 else output1
    x2 = output2.reshape(Bp, Dp) if g > 1 else output2
    lab = label.reshape(Bp, g) if g > 1 else label

    isz = int(jnp.dtype(output1.dtype).itemsize)
    # Per-packed-row VMEM cost: x1/x2 double-buffered, label buffer lane-padded
    # to 128, plus ~3 live f32 temporaries (upcast / diff / sq) in the kernel.
    row_cost = 2 * 2 * Dp * isz + 2 * 128 * 4 + 3 * Dp * 4
    budget = _vmem_budget_bytes()

    if block_rows is not None:
        tb = max(1, min(int(block_rows), Bp))
    else:
        tb = max(1, budget // row_cost)
        # Keep >= 4 (>= 2) grid steps on non-trivial batches so v7x uses both
        # TensorCores and DMA/compute have something to overlap.
        if Bp >= 32:
            tb = min(tb, -(-Bp // 4))
        elif Bp >= 16:
            tb = min(tb, -(-Bp // 2))
        tb = min(tb, Bp)

    if Bp <= 8 or tb >= Bp:
        tb = Bp                         # single full-array block (always legal)
    else:
        tb = max(8, (tb // 8) * 8)      # sublane-aligned tile

    num_tiles = -(-Bp // tb)
    margin_arr = jnp.asarray([margin], dtype=jnp.float32)

    kernel = functools.partial(_contrastive_kernel, groups=g, seg_len=D,
                               tile_rows=tb, valid_rows=Bp)

    partial = pl.pallas_call(
        kernel,
        out_shape=jax.ShapeDtypeStruct((num_tiles, 8, 128), jnp.float32),
        grid=(num_tiles,),
        in_specs=[
            pl.BlockSpec(memory_space=pltpu.MemorySpace.SMEM),   # margin (1,)
            pl.BlockSpec((tb, Dp), lambda i: (i, 0)),            # output1
            pl.BlockSpec((tb, Dp), lambda i: (i, 0)),            # output2
            pl.BlockSpec((tb, g), lambda i: (i, 0)),             # label
        ],
        out_specs=pl.BlockSpec((1, 8, 128), lambda i: (i, 0, 0)),
        compiler_params=pltpu.CompilerParams(
            dimension_semantics=("parallel",),
            vmem_limit_bytes=int(2 * budget),
        ),
    )(margin_arr, x1, x2, lab)

    # Tiny epilogue in XLA: one scalar per tile, exact sum / B == torch.mean.
    return jnp.sum(partial[:, 0, 0]) / B


def contrastive_loss_ref(output1, output2, label, margin=2.0):
    # Pure-JAX reference mirroring the PyTorch semantics (f32 math).
    x1 = output1.astype(jnp.float32)
    x2 = output2.astype(jnp.float32)
    lb = label.astype(jnp.float32)
    diff = x1 - x2 + PAIRWISE_EPS
    d = jnp.sqrt(jnp.sum(diff * diff, axis=1, keepdims=True))   # (B, 1)
    return jnp.mean((1.0 - lb) * (d ** 2)
                    + lb * jnp.maximum(margin - d, 0.0) ** 2)


if __name__ == "__main__":
    ok = True

    # --- Test 1: small f32 problem, packed lane-dense path, single tile -----
    k1, k2, k3 = jax.random.split(jax.random.PRNGKey(0), 3)
    B, D = 8, 32
    o1 = jax.random.normal(k1, (B, D), dtype=jnp.float32)
    o2 = jax.random.normal(k2, (B, D), dtype=jnp.float32)
    lb = jax.random.bernoulli(k3, 0.5, (B, 1)).astype(jnp.float32)
    got = contrastive_loss(o1, o2, lb, margin=2.0)
    jax.block_until_ready(got)
    ref = contrastive_loss_ref(o1, o2, lb, margin=2.0)
    ok &= bool(jnp.allclose(got, ref, rtol=1e-5, atol=1e-5))

    # --- Test 2: multi-tile packed path with a masked partial last tile -----
    ka, kb, kc = jax.random.split(jax.random.PRNGKey(1), 3)
    B2, D2 = 200, 32
    a1 = jax.random.normal(ka, (B2, D2), dtype=jnp.float32)
    a2 = jax.random.normal(kb, (B2, D2), dtype=jnp.float32)
    l2 = jax.random.bernoulli(kc, 0.5, (B2, 1)).astype(jnp.float32)
    got2 = contrastive_loss(a1, a2, l2, margin=2.0, block_rows=16)
    jax.block_until_ready(got2)
    ref2 = contrastive_loss_ref(a1, a2, l2, margin=2.0)
    ok &= bool(jnp.allclose(got2, ref2, rtol=1e-5, atol=1e-5))

    # --- Test 3: native bf16 inputs streamed over HBM (kernel upcasts) ------
    b1 = o1.astype(jnp.bfloat16)
    b2 = o2.astype(jnp.bfloat16)
    got3 = contrastive_loss(b1, b2, lb, margin=1.5)
    jax.block_until_ready(got3)
    ref3 = contrastive_loss_ref(b1, b2, lb, margin=1.5)
    ok &= bool(jnp.allclose(got3, ref3, rtol=1e-5, atol=1e-5))

    # --- Test 4: unpacked fallback (D not a divisor of 128), partial tile ---
    kd, ke, kf = jax.random.split(jax.random.PRNGKey(2), 3)
    B4, D4 = 70, 40
    c1 = jax.random.normal(kd, (B4, D4), dtype=jnp.float32)
    c2 = jax.random.normal(ke, (B4, D4), dtype=jnp.float32)
    l4 = jax.random.bernoulli(kf, 0.5, (B4, 1)).astype(jnp.float32)
    got4 = contrastive_loss(c1, c2, l4, margin=2.0)
    jax.block_until_ready(got4)
    ref4 = contrastive_loss_ref(c1, c2, l4, margin=2.0)
    ok &= bool(jnp.allclose(got4, ref4, rtol=1e-5, atol=1e-5))

    assert ok, (got, ref, got2, ref2, got3, ref3, got4, ref4)
    print("KERNEL_OK")
</pallas_src>

<mosaic_0001>
module attributes {stable_mosaic.version = 11 : i64} {
  func.func @_contrastive_kernel(%arg0: i32, %arg1: memref<1xf32, #tpu.memory_space<smem>>, %arg2: memref<2x128xf32, #tpu.memory_space<vmem>>, %arg3: memref<2x128xf32, #tpu.memory_space<vmem>>, %arg4: memref<2x4xf32, #tpu.memory_space<vmem>>, %arg5: memref<1x8x128xf32, #tpu.memory_space<vmem>>) attributes {dimension_semantics = [#tpu.dimension_semantics<parallel>], iteration_bounds = array<i64: 1>, scalar_prefetch = 0 : i64, scratch_operands = 0 : i64, tpu.core_type = #tpu.core_type<tc>, window_params = [{transform_indices = @transform_0, window_bounds = array<i64: 1>}, {transform_indices = @transform_1, window_bounds = array<i64: 2, 128>}, {transform_indices = @transform_2, window_bounds = array<i64: 2, 128>}, {transform_indices = @transform_3, window_bounds = array<i64: 2, 4>}, {transform_indices = @transform_4, window_bounds = array<i64: 1, 8, 128>}]} {
    %c0 = arith.constant 0 : index
    %c0_0 = arith.constant 0 : index
    %0 = vector.load %arg2[%c0, %c0_0] : memref<2x128xf32, #tpu.memory_space<vmem>>, vector<2x128xf32>
    %c0_1 = arith.constant 0 : index
    %c0_2 = arith.constant 0 : index
    %1 = vector.load %arg3[%c0_1, %c0_2] : memref<2x128xf32, #tpu.memory_space<vmem>>, vector<2x128xf32>
    %c0_3 = arith.constant 0 : index
    %c0_4 = arith.constant 0 : index
    %2 = vector.load %arg4[%c0_3, %c0_4] : memref<2x4xf32, #tpu.memory_space<vmem>>, vector<2x4xf32>
    %c0_5 = arith.constant 0 : index
    %3 = memref.load %arg1[%c0_5] : memref<1xf32, #tpu.memory_space<smem>>
    %4 = arith.subf %0, %1 : vector<2x128xf32>
    %cst = arith.constant 9.99999997E-7 : f32
    %5 = vector.broadcast %cst : f32 to vector<2x128xf32>
    %6 = arith.addf %4, %5 : vector<2x128xf32>
    %7 = arith.mulf %6, %6 : vector<2x128xf32>
    %8 = tpu.iota {dimensions = array<i32: 1>} : vector<2x128xi32>
    %9 = tpu.iota {dimensions = array<i32: 1>} : vector<2x4xi32>
    %cst_6 = arith.constant 0.000000e+00 : f32
    %10 = vector.broadcast %cst_6 : f32 to vector<2x1xf32>
    %c0_i32 = arith.constant 0 : i32
    %11 = vector.broadcast %c0_i32 : i32 to vector<2x128xi32>
    %12 = arith.cmpi sge, %8, %11 : vector<2x128xi32>
    %c32_i32 = arith.constant 32 : i32
    %13 = vector.broadcast %c32_i32 : i32 to vector<2x128xi32>
    %14 = arith.cmpi slt, %8, %13 : vector<2x128xi32>
    %15 = arith.andi %12, %14 : vector<2x128xi1>
    %cst_7 = arith.constant 0.000000e+00 : f32
    %16 = vector.broadcast %cst_7 : f32 to vector<2x128xf32>
    %17 = arith.select %15, %7, %16 : vector<2x128xi1>, vector<2x128xf32>
    %cst_8 = arith.constant dense<0.000000e+00> : vector<2xf32>
    %18 = vector.multi_reduction <add>, %17, %cst_8 [1] : vector<2x128xf32> to vector<2xf32>
    %19 = vector.shape_cast %18 : vector<2xf32> to vector<2x1xf32>
    %20 = math.sqrt %19 : vector<2x1xf32>
    %21 = vector.broadcast %3 : f32 to vector<2x1xf32>
    %22 = arith.subf %21, %20 : vector<2x1xf32>
    %cst_9 = arith.constant 0.000000e+00 : f32
    %23 = vector.broadcast %cst_9 : f32 to vector<2x1xf32>
    %24 = arith.maximumf %22, %23 : vector<2x1xf32>
    %c0_i32_10 = arith.constant 0 : i32
    %25 = vector.broadcast %c0_i32_10 : i32 to vector<2x4xi32>
    %26 = arith.cmpi eq, %9, %25 : vector<2x4xi32>
    %cst_11 = arith.constant 0.000000e+00 : f32
    %27 = vector.broadcast %cst_11 : f32 to vector<2x4xf32>
    %28 = arith.select %26, %2, %27 : vector<2x4xi1>, vector<2x4xf32>
    %cst_12 = arith.constant dense<0.000000e+00> : vector<2xf32>
    %29 = vector.multi_reduction <add>, %28, %cst_12 [1] : vector<2x4xf32> to vector<2xf32>
    %30 = vector.shape_cast %29 : vector<2xf32> to vector<2x1xf32>
    %cst_13 = arith.constant 1.000000e+00 : f32
    %31 = vector.broadcast %cst_13 : f32 to vector<2x1xf32>
    %32 = arith.subf %31, %30 : vector<2x1xf32>
    %33 = arith.mulf %32, %19 : vector<2x1xf32>
    %34 = arith.addf %10, %33 : vector<2x1xf32>
    %35 = arith.mulf %24, %24 : vector<2x1xf32>
    %36 = arith.mulf %30, %35 : vector<2x1xf32>
    %37 = arith.addf %34, %36 : vector<2x1xf32>
    %c32_i32_14 = arith.constant 32 : i32
    %38 = vector.broadcast %c32_i32_14 : i32 to vector<2x128xi32>
    %39 = arith.cmpi sge, %8, %38 : vector<2x128xi32>
    %c64_i32 = arith.constant 64 : i32
    %40 = vector.broadcast %c64_i32 : i32 to vector<2x128xi32>
    %41 = arith.cmpi slt, %8, %40 : vector<2x128xi32>
    %42 = arith.andi %39, %41 : vector<2x128xi1>
    %cst_15 = arith.constant 0.000000e+00 : f32
    %43 = vector.broadcast %cst_15 : f32 to vector<2x128xf32>
    %44 = arith.select %42, %7, %43 : vector<2x128xi1>, vector<2x128xf32>
    %cst_16 = arith.constant dense<0.000000e+00> : vector<2xf32>
    %45 = vector.multi_reduction <add>, %44, %cst_16 [1] : vector<2x128xf32> to vector<2xf32>
    %46 = vector.shape_cast %45 : vector<2xf32> to vector<2x1xf32>
    %47 = math.sqrt %46 : vector<2x1xf32>
    %48 = vector.broadcast %3 : f32 to vector<2x1xf32>
    %49 = arith.subf %48, %47 : vector<2x1xf32>
    %cst_17 = arith.constant 0.000000e+00 : f32
    %50 = vector.broadcast %cst_17 : f32 to vector<2x1xf32>
    %51 = arith.maximumf %49, %50 : vector<2x1xf32>
    %c1_i32 = arith.constant 1 : i32
    %52 = vector.broadcast %c1_i32 : i32 to vector<2x4xi32>
    %53 = arith.cmpi eq, %9, %52 : vector<2x4xi32>
    %cst_18 = arith.constant 0.000000e+00 : f32
    %54 = vector.broadcast %cst_18 : f32 to vector<2x4xf32>
    %55 = arith.select %53, %2, %54 : vector<2x4xi1>, vector<2x4xf32>
    %cst_19 = arith.constant dense<0.000000e+00> : vector<2xf32>
    %56 = vector.multi_reduction <add>, %55, %cst_19 [1] : vector<2x4xf32> to vector<2xf32>
    %57 = vector.shape_cast %56 : vector<2xf32> to vector<2x1xf32>
    %cst_20 = arith.constant 1.000000e+00 : f32
    %58 = vector.broadcast %cst_20 : f32 to vector<2x1xf32>
    %59 = arith.subf %58, %57 : vector<2x1xf32>
    %60 = arith.mulf %59, %46 : vector<2x1xf32>
    %61 = arith.addf %37, %60 : vector<2x1xf32>
    %62 = arith.mulf %51, %51 : vector<2x1xf32>
    %63 = arith.mulf %57, %62 : vector<2x1xf32>
    %64 = arith.addf %61, %63 : vector<2x1xf32>
    %c64_i32_21 = arith.constant 64 : i32
    %65 = vector.broadcast %c64_i32_21 : i32 to vector<2x128xi32>
    %66 = arith.cmpi sge, %8, %65 : vector<2x128xi32>
    %c96_i32 = arith.constant 96 : i32
    %67 = vector.broadcast %c96_i32 : i32 to vector<2x128xi32>
    %68 = arith.cmpi slt, %8, %67 : vector<2x128xi32>
    %69 = arith.andi %66, %68 : vector<2x128xi1>
    %cst_22 = arith.constant 0.000000e+00 : f32
    %70 = vector.broadcast %cst_22 : f32 to vector<2x128xf32>
    %71 = arith.select %69, %7, %70 : vector<2x128xi1>, vector<2x128xf32>
    %cst_23 = arith.constant dense<0.000000e+00> : vector<2xf32>
    %72 = vector.multi_reduction <add>, %71, %cst_23 [1] : vector<2x128xf32> to vector<2xf32>
    %73 = vector.shape_cast %72 : vector<2xf32> to vector<2x1xf32>
    %74 = math.sqrt %73 : vector<2x1xf32>
    %75 = vector.broadcast %3 : f32 to vector<2x1xf32>
    %76 = arith.subf %75, %74 : vector<2x1xf32>
    %cst_24 = arith.constant 0.000000e+00 : f32
    %77 = vector.broadcast %cst_24 : f32 to vector<2x1xf32>
    %78 = arith.maximumf %76, %77 : vector<2x1xf32>
    %c2_i32 = arith.constant 2 : i32
    %79 = vector.broadcast %c2_i32 : i32 to vector<2x4xi32>
    %80 = arith.cmpi eq, %9, %79 : vector<2x4xi32>
    %cst_25 = arith.constant 0.000000e+00 : f32
    %81 = vector.broadcast %cst_25 : f32 to vector<2x4xf32>
    %82 = arith.select %80, %2, %81 : vector<2x4xi1>, vector<2x4xf32>
    %cst_26 = arith.constant dense<0.000000e+00> : vector<2xf32>
    %83 = vector.multi_reduction <add>, %82, %cst_26 [1] : vector<2x4xf32> to vector<2xf32>
    %84 = vector.shape_cast %83 : vector<2xf32> to vector<2x1xf32>
    %cst_27 = arith.constant 1.000000e+00 : f32
    %85 = vector.broadcast %cst_27 : f32 to vector<2x1xf32>
    %86 = arith.subf %85, %84 : vector<2x1xf32>
    %87 = arith.mulf %86, %73 : vector<2x1xf32>
    %88 = arith.addf %64, %87 : vector<2x1xf32>
    %89 = arith.mulf %78, %78 : vector<2x1xf32>
    %90 = arith.mulf %84, %89 : vector<2x1xf32>
    %91 = arith.addf %88, %90 : vector<2x1xf32>
    %c96_i32_28 = arith.constant 96 : i32
    %92 = vector.broadcast %c96_i32_28 : i32 to vector<2x128xi32>
    %93 = arith.cmpi sge, %8, %92 : vector<2x128xi32>
    %c128_i32 = arith.constant 128 : i32
    %94 = vector.broadcast %c128_i32 : i32 to vector<2x128xi32>
    %95 = arith.cmpi slt, %8, %94 : vector<2x128xi32>
    %96 = arith.andi %93, %95 : vector<2x128xi1>
    %cst_29 = arith.constant 0.000000e+00 : f32
    %97 = vector.broadcast %cst_29 : f32 to vector<2x128xf32>
    %98 = arith.select %96, %7, %97 : vector<2x128xi1>, vector<2x128xf32>
    %cst_30 = arith.constant dense<0.000000e+00> : vector<2xf32>
    %99 = vector.multi_reduction <add>, %98, %cst_30 [1] : vector<2x128xf32> to vector<2xf32>
    %100 = vector.shape_cast %99 : vector<2xf32> to vector<2x1xf32>
    %101 = math.sqrt %100 : vector<2x1xf32>
    %102 = vector.broadcast %3 : f32 to vector<2x1xf32>
    %103 = arith.subf %102, %101 : vector<2x1xf32>
    %cst_31 = arith.constant 0.000000e+00 : f32
    %104 = vector.broadcast %cst_31 : f32 to vector<2x1xf32>
    %105 = arith.maximumf %103, %104 : vector<2x1xf32>
    %c3_i32 = arith.constant 3 : i32
    %106 = vector.broadcast %c3_i32 : i32 to vector<2x4xi32>
    %107 = arith.cmpi eq, %9, %106 : vector<2x4xi32>
    %cst_32 = arith.constant 0.000000e+00 : f32
    %108 = vector.broadcast %cst_32 : f32 to vector<2x4xf32>
    %109 = arith.select %107, %2, %108 : vector<2x4xi1>, vector<2x4xf32>
    %cst_33 = arith.constant dense<0.000000e+00> : vector<2xf32>
    %110 = vector.multi_reduction <add>, %109, %cst_33 [1] : vector<2x4xf32> to vector<2xf32>
    %111 = vector.shape_cast %110 : vector<2xf32> to vector<2x1xf32>
    %cst_34 = arith.constant 1.000000e+00 : f32
    %112 = vector.broadcast %cst_34 : f32 to vector<2x1xf32>
    %113 = arith.subf %112, %111 : vector<2x1xf32>
    %114 = arith.mulf %113, %100 : vector<2x1xf32>
    %115 = arith.addf %91, %114 : vector<2x1xf32>
    %116 = arith.mulf %105, %105 : vector<2x1xf32>
    %117 = arith.mulf %111, %116 : vector<2x1xf32>
    %118 = arith.addf %115, %117 : vector<2x1xf32>
    %119 = tpu.iota {dimensions = array<i32: 0>} : vector<2x1xi32>
    %c2_i32_35 = arith.constant 2 : i32
    %120 = arith.muli %arg0, %c2_i32_35 : i32
    %121 = vector.broadcast %120 : i32 to vector<2x1xi32>
    %122 = arith.addi %121, %119 : vector<2x1xi32>
    %c2_i32_36 = arith.constant 2 : i32
    %123 = vector.broadcast %c2_i32_36 : i32 to vector<2x1xi32>
    %124 = arith.cmpi slt, %122, %123 : vector<2x1xi32>
    %cst_37 = arith.constant 0.000000e+00 : f32
    %125 = vector.broadcast %cst_37 : f32 to vector<2x1xf32>
    %126 = arith.select %124, %118, %125 : vector<2x1xi1>, vector<2x1xf32>
    %127 = vector.shape_cast %126 : vector<2x1xf32> to vector<1x2x1xf32>
    %cst_38 = arith.constant dense<0.000000e+00> : vector<1xf32>
    %128 = vector.multi_reduction <add>, %127, %cst_38 [1, 2] : vector<1x2x1xf32> to vector<1xf32>
    %129 = vector.shape_cast %128 : vector<1xf32> to vector<1x1x1xf32>
    %130 = vector.extract %129[0, 0, 0] : f32 from vector<1x1x1xf32>
    %cst_39 = arith.constant 0.000000e+00 : f32
    %131 = vector.broadcast %cst_39 : f32 to vector<1x8x128xf32>
    %132 = vector.broadcast %130 : f32 to vector<1x8x128xf32>
    %133 = arith.addf %131, %132 : vector<1x8x128xf32>
    %c0_40 = arith.constant 0 : index
    %c0_41 = arith.constant 0 : index
    %c0_42 = arith.constant 0 : index
    %134 = vector.load %arg5[%c0_40, %c0_41, %c0_42] : memref<1x8x128xf32, #tpu.memory_space<vmem>>, vector<1x8x128xf32>
    tpu.vector_store %arg5[%c0_40, %c0_41, %c0_42], %133 {strides = array<i32>} : memref<1x8x128xf32, #tpu.memory_space<vmem>>, vector<1x8x128xf32>,
    return
  }
  func.func @transform_0(%arg0: i32) -> i32 {
    %c0_i32 = arith.constant 0 : i32
    %c0_i32_0 = arith.constant 0 : i32
    return %c0_i32 : i32
  }
  func.func @transform_1(%arg0: i32) -> (i32, i32) {
    %c0_i32 = arith.constant 0 : i32
    %c0_i32_0 = arith.constant 0 : i32
    return %arg0, %c0_i32 : i32, i32
  }
  func.func @transform_2(%arg0: i32) -> (i32, i32) {
    %c0_i32 = arith.constant 0 : i32
    %c0_i32_0 = arith.constant 0 : i32
    return %arg0, %c0_i32 : i32, i32
  }
  func.func @transform_3(%arg0: i32) -> (i32, i32) {
    %c0_i32 = arith.constant 0 : i32
    %c0_i32_0 = arith.constant 0 : i32
    return %arg0, %c0_i32 : i32, i32
  }
  func.func @transform_4(%arg0: i32) -> (i32, i32, i32) {
    %c0_i32 = arith.constant 0 : i32
    %c0_i32_0 = arith.constant 0 : i32
    %c0_i32_1 = arith.constant 0 : i32
    return %arg0, %c0_i32, %c0_i32_0 : i32, i32, i32
  }
}

</mosaic_0001>

<llo_original>
// kernel: tpu_custom_call.1
$region0: #{tpu_custom_call.1}
  #allocation0 [shape = 'u32[]', space=smem, size = 0x4, offset = 0x4, fixed_abs, tag = 'smem constant byte address 0x4 - core index']
  #allocation1 [shape = 'u32[72,128]{1,0:T(1,128)}', space=vmem, size = 0x9000, scoped, tag = 'internal scratch']
  #allocation2 [shape = 'f32[1]{0:T(128)S(6)}', space=smem, size = 0x200, scoped, tag = 'scoped memory for tpu_custom_call.1']
  %s0 = inlined_call_operand.<no memory space> [shape: f32[1], index: 0, kind: input, shape index: {}]
  %s1 = inlined_call_operand.vmem [shape: f32[2,128], index: 1, kind: input, shape index: {}]
  %s2 = inlined_call_operand.hbm [shape: f32[2,128], index: 2, kind: input, shape index: {}]
  %s3 = inlined_call_operand.hbm [shape: f32[2,4], index: 3, kind: input, shape index: {}]
  %s4 = inlined_call_operand.hbm [shape: f32[1,8,128], index: 4, kind: output, shape index: {}]
  %s5 = sld [smem:[#allocation0]]
  $region34: #{tpu_custom_call.1} parent=0
    _
  %s7 = ssub.s32 1, %s5
  %s8 = scalar_select 0, %s7, %s5
  %9 = sst [smem:[#allocation2]] %s0
  $region1: #{tpu_custom_call.1} parent=0
    #allocation3 [shape = 'u8[1024]{0}', space=vmem, size = 0x400, scoped, tag = 'input window, operand 2, single buffered']
    #allocation4 [shape = 's32[1]{0}', space=sflag, size = 0x4, scoped, tag = 'scoped memory for tpu_custom_call.1']
    #allocation5 [shape = 's32[1]{0}', space=sflag, size = 0x4, scoped, tag = 'scoped memory for tpu_custom_call.1']
    #allocation6 [shape = 'u8[1024]{0}', space=vmem, size = 0x400, scoped, tag = 'input window, operand 3, single buffered']
    #allocation7 [shape = 's32[1]{0}', space=sflag, size = 0x4, scoped, tag = 'scoped memory for tpu_custom_call.1']
    #allocation8 [shape = 'u8[4096]{0}', space=vmem, size = 0x1000, scoped, tag = 'output window, operand 0, single buffered']
    %10 = vsyncpa [#allocation4], 0
    %11 = vsyncpa [#allocation7], 0
    %12 = vsyncpa [#allocation5], 0
    // Predicated region
    $region2: #{tpu_custom_call.1} parent=1 // pred_check
      _
    $region3: #{tpu_custom_call.1} parent=1 // pred_check_branch
      %14 = sbr.rel (0) target = $region5
    $region4: #{tpu_custom_call.1} parent=1 // pred_region
      _
    $region5: #{tpu_custom_call.1} parent=1 // pred_fallthru
      _
    // Predicated region
    $region6: #{tpu_custom_call.1} parent=1 // pred_check
      _
    $region7: #{tpu_custom_call.1} parent=1 // pred_check_branch
      %16 = sbr.rel (0) target = $region9
    $region8: #{tpu_custom_call.1} parent=1 // pred_region
      _
    $region9: #{tpu_custom_call.1} parent=1 // pred_fallthru
      _
    // Predicated region
    $region10: #{tpu_custom_call.1} parent=1 // pred_check
      _
    $region11: #{tpu_custom_call.1} parent=1 // pred_check_branch
      %18 = sbr.rel (0) target = $region13
    $region12: #{tpu_custom_call.1} parent=1 // pred_region
      %20 = vsyncadd [#allocation4], 0
      %s22 = sshll.u32 %s2, 4
      %s23 = int_to_ptr.hbm [resolvable:$true] %s22
      %s24 = sshll.u32 [#allocation3], 4
      %s25 = int_to_ptr.vmem [resolvable:$true] %s24
      %27 = dma.hbm_to_vmem [thread:$0]  %s23, 32, %s25, [#allocation4]
    $region13: #{tpu_custom_call.1} parent=1 // pred_fallthru
      _
    // Predicated region
    $region14: #{tpu_custom_call.1} parent=1 // pred_check
      _
    $region15: #{tpu_custom_call.1} parent=1 // pred_check_branch
      %29 = sbr.rel (0) target = $region17
    $region16: #{tpu_custom_call.1} parent=1 // pred_region
      %31 = vsyncadd [#allocation7], 0
      %s33 = sshll.u32 %s3, 4
      %s34 = int_to_ptr.hbm [resolvable:$true] %s33
      %s35 = sshll.u32 [#allocation6], 4
      %s36 = int_to_ptr.vmem [resolvable:$true] %s35
      %38 = dma.hbm_to_vmem [thread:$0]  %s34, 32, %s36, [#allocation7]
    $region17: #{tpu_custom_call.1} parent=1 // pred_fallthru
      _
    // Predicated region
    $region18: #{tpu_custom_call.1} parent=1 // pred_check
      _
    $region19: #{tpu_custom_call.1} parent=1 // pred_check_branch
      %40 = sbr.rel (0) target = $region21
    $region20: #{tpu_custom_call.1} parent=1 // pred_region
      %42 = dma.done [#allocation4], 32
    $region21: #{tpu_custom_call.1} parent=1 // pred_fallthru
      _
    // Predicated region
    $region22: #{tpu_custom_call.1} parent=1 // pred_check
      _
    $region23: #{tpu_custom_call.1} parent=1 // pred_check_branch
      %44 = sbr.rel (0) target = $region25
    $region24: #{tpu_custom_call.1} parent=1 // pred_region
      %46 = dma.done [#allocation7], 32
    $region25: #{tpu_custom_call.1} parent=1 // pred_fallthru
      _
    %v47 = vld [vmem:[%s1] sm:$0x3]
    %v48 = vld [vmem:[#allocation3] sm:$0x3]
    %v49 = vld [vmem:[#allocation6] sm:$0x3]
    %s50 = sld [smem:[#allocation2]]
    %v51 = vsub.f32 %v47, %v48
    %v52 = vadd.f32 %v51, 1e-06
    %v53 = vmul.f32 %v52, %v52
    %v54 = vlaneseq
    %v55 = vand.u32 %v54, 127
    %vm56 = vcmp.ge.s32.totalorder %v55, 0
    %vm57 = vcmp.lt.s32.totalorder %v55, 32
    %vm58 = vmand %vm56, %vm57
    %v59 = vsel %vm58, %v53, 0.0
    %vm60 = vcmask 1041408
    %v61 = vsel %vm60, %v59, 0.0
    %62 = vadd.xlane.f32.xlu0 %v61
    %v63 = vpop.xlane.xlu0 %62
    %v64 = vrsqrt.pop %v63
    %v65 = vmul.f32 %v64, %v63
    %v66 = vmul.f32 %v65, %v64
    %v67 = vmul.f32 0.5, %v66
    %v68 = vsub.f32 1.5, %v67
    %v69 = vmul.f32 %v64, %v68
    %v70 = vmul.f32 %v63, %v69
    %vm71 = vcmp.eq.f32.partialorder %v63, inf
    %v72 = vsel %vm71, %v63, %v70
    %vm73 = vcmp.eq.f32.partialorder %v63, 0.0
    %v74 = vand.u32 %v63, 2147483648
    %v75 = vsel %vm73, %v74, %v72
    %v76 = vstv %s50
    %v77 = vsub.f32 %v76, %v75
    %v78 = vmax.f32 %v77, 0.0
    %vm79 = vcmp.eq.s32.totalorder %v55, 0
    %v80 = vsel %vm79, %v49, 0.0
    %vm81 = vcmask 25600
    %v82 = vsel %vm81, %v80, 0.0
    %83 = vadd.xlane.f32.xlu0 %v82
    %v84 = vpop.xlane.xlu0 %83
    %v85 = vsub.f32 1.0, %v84
    %v86 = vmul.f32 %v85, %v63
    %v87 = vadd.f32 %v86, 0.0
    %v88 = vmul.f32 %v78, %v78
    %v89 = vmul.f32 %v84, %v88
    %v90 = vadd.f32 %v87, %v89
    %vm91 = vcmp.ge.s32.totalorder %v55, 32
    %vm92 = vcmp.lt.s32.totalorder %v55, 64
    %vm93 = vmand %vm91, %vm92
    %v94 = vsel %vm93, %v53, 0.0
    %v95 = vsel %vm60, %v94, 0.0
    %96 = vadd.xlane.f32.xlu0 %v95
    %v97 = vpop.xlane.xlu0 %96
    %v98 = vrsqrt.pop %v97
    %v99 = vmul.f32 %v98, %v97
    %v100 = vmul.f32 %v99, %v98
    %v101 = vmul.f32 0.5, %v100
    %v102 = vsub.f32 1.5, %v101
    %v103 = vmul.f32 %v98, %v102
    %v104 = vmul.f32 %v97, %v103
    %vm105 = vcmp.eq.f32.partialorder %v97, inf
    %v106 = vsel %vm105, %v97, %v104
    %vm107 = vcmp.eq.f32.partialorder %v97, 0.0
    %v108 = vand.u32 %v97, 2147483648
    %v109 = vsel %vm107, %v108, %v106
    %v110 = vsub.f32 %v76, %v109
    %v111 = vmax.f32 %v110, 0.0
    %vm112 = vcmp.eq.s32.totalorder %v55, 1
    %v113 = vsel %vm112, %v49, 0.0
    %v114 = vsel %vm81, %v113, 0.0
    %115 = vadd.xlane.f32.xlu0 %v114
    %v116 = vpop.xlane.xlu0 %115
    %v117 = vsub.f32 1.0, %v116
    %v118 = vmul.f32 %v117, %v97
    %v119 = vadd.f32 %v90, %v118
    %v120 = vmul.f32 %v111, %v111
    %v121 = vmul.f32 %v116, %v120
    %v122 = vadd.f32 %v119, %v121
    %vm123 = vcmp.ge.s32.totalorder %v55, 64
    %vm124 = vcmp.lt.s32.totalorder %v55, 96
    %vm125 = vmand %vm123, %vm124
    %v126 = vsel %vm125, %v53, 0.0
    %v127 = vsel %vm60, %v126, 0.0
    %128 = vadd.xlane.f32.xlu0 %v127
    %v129 = vpop.xlane.xlu0 %128
    %v130 = vrsqrt.pop %v129
    %v131 = vmul.f32 %v130, %v129
    %v132 = vmul.f32 %v131, %v130
    %v133 = vmul.f32 0.5, %v132
    %v134 = vsub.f32 1.5, %v133
    %v135 = vmul.f32 %v130, %v134
    %v136 = vmul.f32 %v129, %v135
    %vm137 = vcmp.eq.f32.partialorder %v129, inf
    %v138 = vsel %vm137, %v129, %v136
    %vm139 = vcmp.eq.f32.partialorder %v129, 0.0
    %v140 = vand.u32 %v129, 2147483648
    %v141 = vsel %vm139, %v140, %v138
    %v142 = vsub.f32 %v76, %v141
    %v143 = vmax.f32 %v142, 0.0
    %vm144 = vcmp.eq.s32.totalorder %v55, 2
    %v145 = vsel %vm144, %v49, 0.0
    %v146 = vsel %vm81, %v145, 0.0
    %147 = vadd.xlane.f32.xlu0 %v146
    %v148 = vpop.xlane.xlu0 %147
    %v149 = vsub.f32 1.0, %v148
    %v150 = vmul.f32 %v149, %v129
    %v151 = vadd.f32 %v122, %v150
    %v152 = vmul.f32 %v143, %v143
    %v153 = vmul.f32 %v148, %v152
    %v154 = vadd.f32 %v151, %v153
    %vm155 = vcmp.ge.s32.totalorder %v55, 96
    %vm156 = vcmp.lt.s32.totalorder %v55, 128
    %vm157 = vmand %vm155, %vm156
    %v158 = vsel %vm157, %v53, 0.0
    %v159 = vsel %vm60, %v158, 0.0
    %160 = vadd.xlane.f32.xlu0 %v159
    %v161 = vpop.xlane.xlu0 %160
    %v162 = vrsqrt.pop %v161
    %v163 = vmul.f32 %v162, %v161
    %v164 = vmul.f32 %v163, %v162
    %v165 = vmul.f32 0.5, %v164
    %v166 = vsub.f32 1.5, %v165
    %v167 = vmul.f32 %v162, %v166
    %v168 = vmul.f32 %v161, %v167
    %vm169 = vcmp.eq.f32.partialorder %v161, inf
    %v170 = vsel %vm169, %v161, %v168
    %vm171 = vcmp.eq.f32.partialorder %v161, 0.0
    %v172 = vand.u32 %v161, 2147483648
    %v173 = vsel %vm171, %v172, %v170
    %v174 = vsub.f32 %v76, %v173
    %v175 = vmax.f32 %v174, 0.0
    %vm176 = vcmp.eq.s32.totalorder %v55, 3
    %v177 = vsel %vm176, %v49, 0.0
    %v178 = vsel %vm81, %v177, 0.0
    %179 = vadd.xlane.f32.xlu0 %v178
    %v180 = vpop.xlane.xlu0 %179
    %v181 = vsub.f32 1.0, %v180
    %v182 = vmul.f32 %v181, %v161
    %v183 = vadd.f32 %v154, %v182
    %v184 = vmul.f32 %v175, %v175
    %v185 = vmul.f32 %v180, %v184
    %v186 = vadd.f32 %v183, %v185
    %v187 = vlaneseq
    %v188 = vshrl.u32 %v187, 7
    %s189 = smul.u32 0, 2
    %v190 = vstv %s189
    %v191 = vadd.s32 %v190, %v188
    %vm192 = vcmp.lt.s32.totalorder %v191, 2
    %v193 = vsel %vm192, %v186, 0.0
    %vm194 = vcmask 1024
    %v195 = vsel %vm194, %v193, 0.0
    %196 = vadd.xlane.f32.xlu0 %v195
    %v197 = vpop.xlane.xlu0 %196
    %v198 = vrot.slane %v197, 4
    %v199 = vadd.f32 %v197, %v198
    %v200 = vrot.slane %v199, 2
    %v201 = vadd.f32 %v199, %v200
    %v202 = vrot.slane %v201, 1
    %v203 = vadd.f32 %v201, %v202
    %s204 = vtos %v203
    %v205 = vstv %s204
    %v206 = vadd.f32 %v205, 0.0
    %207 = vst [vmem:[#allocation8] sm:$0xff] %v206
    // Predicated region
    $region26: #{tpu_custom_call.1} parent=1 // pred_check
      _
    $region27: #{tpu_custom_call.1} parent=1 // pred_check_branch
      %209 = sbr.rel (0) target = $region29
    $region28: #{tpu_custom_call.1} parent=1 // pred_region
      %211 = vsyncadd [#allocation5], 0
      %s213 = sshll.u32 [#allocation8], 4
      %s214 = int_to_ptr.vmem [resolvable:$true] %s213
      %s215 = sshll.u32 %s4, 4
      %s216 = int_to_ptr.hbm [resolvable:$true] %s215
      %218 = dma.vmem_to_hbm [thread:$0]  %s214, 128, %s216, [#allocation5]
    $region29: #{tpu_custom_call.1} parent=1 // pred_fallthru
      _
    // Predicated region
    $region30: #{tpu_custom_call.1} parent=1 // pred_check
      _
    $region31: #{tpu_custom_call.1} parent=1 // pred_check_branch
      %220 = sbr.rel (0) target = $region33
    $region32: #{tpu_custom_call.1} parent=1 // pred_region
      %222 = dma.done [#allocation5], 128
    $region33: #{tpu_custom_call.1} parent=1 // pred_fallthru
      _
    %223 = vsyncpa [#allocation4], 1
    %224 = vsyncpa [#allocation7], 1
    %225 = vsyncpa [#allocation5], 1

</llo_original>
